<compile_context>
chip_gen: v6e
topology: v6e:2x2x1
jax: 0.10.0
libtpu: 0.0.40
codegen_flags: <defaults>
</compile_context>

<pallas_src>
import functools

import jax
import jax.numpy as jnp
from jax.experimental import pallas as pl
from jax.experimental.pallas import tpu as pltpu

LANE = 128     # pad contraction / channel / class dims to full lane width
SUBLANE = 8    # batches per output slab (one logit row per sublane)


# ----------------------------------------------------------------------------
# Fused Pallas kernel: conv-as-matmul + bias + ReLU + global-avg-pool + Linear
# One grid step == one group of up to 8 batch elements (disjoint output block).
# ----------------------------------------------------------------------------
def fused_conv_pool_fc_kernel(patches_ref, w_ref, b_ref, fcw_ref, fcb_ref,
                              out_ref, *, hw, gb):
    # patches_ref: (gb*hw, 128)  im2col'd 3x3 patches for this batch group
    # w_ref:       (128, 128)    conv weight as matmul (zero-padded)
    # b_ref:       (1, 128)      conv bias (zero-padded)
    # fcw_ref:     (128, 128)    FC weight with 1/(H*W) pre-folded in
    # fcb_ref:     (1, 128)      FC bias (zero-padded)
    # out_ref:     (8, 128)      row b = logits of batch (group*gb + b), b < gb
    feat = jnp.dot(patches_ref[...], w_ref[...],
                   preferred_element_type=jnp.float32)           # MXU
    feat = jnp.maximum(feat + b_ref[...], 0.0)                   # (gb*hw,128) VPU
    # per-batch spatial sum (1/(H*W) lives in fcw) -> one sublane row per batch
    rows = [jnp.sum(feat[b * hw:(b + 1) * hw, :], axis=0, keepdims=True)
            for b in range(gb)]                                  # gb x (1,128)
    if gb < SUBLANE:
        rows.append(jnp.zeros((SUBLANE - gb, LANE), jnp.float32))
    pooled = jnp.concatenate(rows, axis=0)                       # (8, 128)
    out_ref[...] = jnp.dot(pooled, fcw_ref[...],
                           preferred_element_type=jnp.float32) + fcb_ref[...]


# ----------------------------------------------------------------------------
# Wrapper ("internal model" forward)
# ----------------------------------------------------------------------------
def compressnn_forward(x_nchw, conv_w, conv_b, fc_w, fc_b):
    """x_nchw: (B, C_in, H, W) float32.  Returns logits (B, num_classes)."""
    B, Cin, H, W = x_nchw.shape
    Cout, _, KH, KW = conv_w.shape
    num_classes = fc_w.shape[0]
    K = KH * KW * Cin
    HW = H * W

    GB = min(B, SUBLANE)          # batches per grid step
    G = -(-B // GB)               # number of groups (grid size)
    B_pad = G * GB

    # --- glue: NCHW -> NHWC, pad, im2col (host-side XLA) --------------------
    x = jnp.transpose(x_nchw, (0, 2, 3, 1)).astype(jnp.float32)   # (B,H,W,Cin)
    xp = jnp.pad(x, ((0, 0), (1, 1), (1, 1), (0, 0)))             # conv pad=1
    patch_list = []
    for kh in range(KH):
        for kw in range(KW):
            patch_list.append(xp[:, kh:kh + H, kw:kw + W, :])     # (B,H,W,Cin)
    patches = jnp.stack(patch_list, axis=3).reshape(B * HW, K)    # (B*HW, K)
    patches_pad = jnp.pad(patches,
                          ((0, (B_pad - B) * HW), (0, LANE - K)))  # (B_pad*HW,128)

    # conv weight (Cout,Cin,kh,kw) -> (kh,kw,Cin,Cout) -> (K,Cout) -> (128,128)
    w_mat = jnp.transpose(conv_w, (2, 3, 1, 0)).reshape(K, Cout)
    w_pad = jnp.pad(w_mat.astype(jnp.float32),
                    ((0, LANE - K), (0, LANE - Cout)))
    b_pad = jnp.pad(conv_b.astype(jnp.float32).reshape(1, Cout),
                    ((0, 0), (0, LANE - Cout)))

    # FC weight (ncls,Cout) -> (Cout,ncls); fold mean's 1/(H*W); pad to (128,128)
    fcw = fc_w.T.astype(jnp.float32) * (1.0 / float(HW))
    fcw_pad = jnp.pad(fcw, ((0, LANE - Cout), (0, LANE - num_classes)))
    fcb_pad = jnp.pad(fc_b.astype(jnp.float32).reshape(1, num_classes),
                      ((0, 0), (0, LANE - num_classes)))

    # --- single fused Pallas call, grid over batch groups -------------------
    out_padded = pl.pallas_call(
        functools.partial(fused_conv_pool_fc_kernel, hw=HW, gb=GB),
        out_shape=jax.ShapeDtypeStruct((G * SUBLANE, LANE), jnp.float32),
        grid=(G,),
        in_specs=[
            pl.BlockSpec((GB * HW, LANE), lambda g: (g, 0)),  # per-group patches
            pl.BlockSpec((LANE, LANE), lambda g: (0, 0)),     # conv weight
            pl.BlockSpec((1, LANE), lambda g: (0, 0)),        # conv bias
            pl.BlockSpec((LANE, LANE), lambda g: (0, 0)),     # fc weight
            pl.BlockSpec((1, LANE), lambda g: (0, 0)),        # fc bias
        ],
        out_specs=pl.BlockSpec((SUBLANE, LANE), lambda g: (g, 0)),
        compiler_params=pltpu.CompilerParams(
            dimension_semantics=("parallel",)),                # 2 TCs on v7x
    )(patches_pad, w_pad, b_pad, fcw_pad, fcb_pad)              # (G*8, 128)

    # rows 0..GB-1 of each 8-row slab hold that group's logits
    logits = out_padded.reshape(G, SUBLANE, LANE)[:, :GB, :].reshape(G * GB, LANE)
    return logits[:B, :num_classes]


# ----------------------------------------------------------------------------
# Pure-JAX reference (correctness check of the Pallas path)
# ----------------------------------------------------------------------------
def reference_forward(x_nchw, conv_w, conv_b, fc_w, fc_b):
    y = jax.lax.conv_general_dilated(
        x_nchw, conv_w, window_strides=(1, 1), padding=((1, 1), (1, 1)),
        dimension_numbers=("NCHW", "OIHW", "NCHW"))
    y = jnp.maximum(y + conv_b[None, :, None, None], 0.0)
    pooled = jnp.mean(y, axis=(2, 3))                              # (B, Cout)
    return pooled @ fc_w.T + fc_b[None, :]


if __name__ == "__main__":
    key = jax.random.PRNGKey(0)
    k_x, k_cw, k_cb, k_fw, k_fb = jax.random.split(key, 5)

    B, Cin, H, W = 2, 4, 16, 16
    Cout, num_classes = 8, 10

    x = jax.random.normal(k_x, (B, Cin, H, W), dtype=jnp.float32)
    conv_w = 0.1 * jax.random.normal(k_cw, (Cout, Cin, 3, 3), dtype=jnp.float32)
    conv_b = 0.1 * jax.random.normal(k_cb, (Cout,), dtype=jnp.float32)
    fc_w = 0.1 * jax.random.normal(k_fw, (num_classes, Cout), dtype=jnp.float32)
    fc_b = 0.1 * jax.random.normal(k_fb, (num_classes,), dtype=jnp.float32)

    out = compressnn_forward(x, conv_w, conv_b, fc_w, fc_b)
    out = jax.block_until_ready(out)

    ref = reference_forward(x, conv_w, conv_b, fc_w, fc_b)
    assert out.shape == (B, num_classes)
    assert jnp.allclose(out, ref, atol=1e-4, rtol=1e-4), "mismatch vs reference"

    print("KERNEL_OK")
</pallas_src>

<mosaic_0001>
module attributes {stable_mosaic.version = 11 : i64} {
  func.func @fused_conv_pool_fc_kernel(%arg0: i32, %arg1: memref<512x128xf32, #tpu.memory_space<vmem>>, %arg2: memref<128x128xf32, #tpu.memory_space<vmem>>, %arg3: memref<1x128xf32, #tpu.memory_space<vmem>>, %arg4: memref<128x128xf32, #tpu.memory_space<vmem>>, %arg5: memref<1x128xf32, #tpu.memory_space<vmem>>, %arg6: memref<8x128xf32, #tpu.memory_space<vmem>>) attributes {dimension_semantics = [#tpu.dimension_semantics<parallel>], iteration_bounds = array<i64: 1>, scalar_prefetch = 0 : i64, scratch_operands = 0 : i64, tpu.core_type = #tpu.core_type<tc>, window_params = [{transform_indices = @transform_0, window_bounds = array<i64: 512, 128>}, {pipeline_mode = #tpu.pipeline_mode<synchronous>, transform_indices = @transform_1, window_bounds = array<i64: 128, 128>}, {pipeline_mode = #tpu.pipeline_mode<synchronous>, transform_indices = @transform_2, window_bounds = array<i64: 1, 128>}, {pipeline_mode = #tpu.pipeline_mode<synchronous>, transform_indices = @transform_3, window_bounds = array<i64: 128, 128>}, {pipeline_mode = #tpu.pipeline_mode<synchronous>, transform_indices = @transform_4, window_bounds = array<i64: 1, 128>}, {transform_indices = @transform_5, window_bounds = array<i64: 8, 128>}]} {
    %c0 = arith.constant 0 : index
    %c0_0 = arith.constant 0 : index
    %0 = vector.load %arg1[%c0, %c0_0] : memref<512x128xf32, #tpu.memory_space<vmem>>, vector<512x128xf32>
    %c0_1 = arith.constant 0 : index
    %c0_2 = arith.constant 0 : index
    %1 = vector.load %arg2[%c0_1, %c0_2] : memref<128x128xf32, #tpu.memory_space<vmem>>, vector<128x128xf32>
    %cst = arith.constant dense<0.000000e+00> : vector<512x128xf32>
    %2 = tpu.matmul %0, %1, %cst {dimension_numbers = #tpu.dot_dimension_numbers<[1], [0], [0], [1], [0, 0, 1, 1], [], []>} : vector<512x128xf32>, vector<128x128xf32>, vector<512x128xf32> -> vector<512x128xf32>
    %c0_3 = arith.constant 0 : index
    %c0_4 = arith.constant 0 : index
    %3 = vector.load %arg3[%c0_3, %c0_4] : memref<1x128xf32, #tpu.memory_space<vmem>>, vector<1x128xf32>
    %4 = vector.broadcast %3 : vector<1x128xf32> to vector<512x128xf32>
    %5 = arith.addf %2, %4 : vector<512x128xf32>
    %cst_5 = arith.constant 0.000000e+00 : f32
    %6 = vector.broadcast %cst_5 : f32 to vector<512x128xf32>
    %7 = arith.maximumf %5, %6 : vector<512x128xf32>
    %8 = vector.extract_strided_slice %7 {offsets = [0, 0], sizes = [256, 128], strides = [1, 1]} : vector<512x128xf32> to vector<256x128xf32>
    %cst_6 = arith.constant dense<0.000000e+00> : vector<128xf32>
    %9 = vector.multi_reduction <add>, %8, %cst_6 [0] : vector<256x128xf32> to vector<128xf32>
    %10 = vector.shape_cast %9 : vector<128xf32> to vector<1x128xf32>
    %11 = vector.extract_strided_slice %7 {offsets = [256, 0], sizes = [256, 128], strides = [1, 1]} : vector<512x128xf32> to vector<256x128xf32>
    %cst_7 = arith.constant dense<0.000000e+00> : vector<128xf32>
    %12 = vector.multi_reduction <add>, %11, %cst_7 [0] : vector<256x128xf32> to vector<128xf32>
    %13 = vector.shape_cast %12 : vector<128xf32> to vector<1x128xf32>
    %cst_8 = arith.constant 0.000000e+00 : f32
    %14 = vector.broadcast %cst_8 : f32 to vector<6x128xf32>
    %15 = tpu.concatenate %10, %13, %14 in 0 : vector<1x128xf32>, vector<1x128xf32>, vector<6x128xf32> -> vector<8x128xf32>
    %c0_9 = arith.constant 0 : index
    %c0_10 = arith.constant 0 : index
    %16 = vector.load %arg4[%c0_9, %c0_10] : memref<128x128xf32, #tpu.memory_space<vmem>>, vector<128x128xf32>
    %cst_11 = arith.constant dense<0.000000e+00> : vector<8x128xf32>
    %17 = tpu.matmul %15, %16, %cst_11 {dimension_numbers = #tpu.dot_dimension_numbers<[1], [0], [0], [1], [0, 0, 1, 1], [], []>} : vector<8x128xf32>, vector<128x128xf32>, vector<8x128xf32> -> vector<8x128xf32>
    %c0_12 = arith.constant 0 : index
    %c0_13 = arith.constant 0 : index
    %18 = vector.load %arg5[%c0_12, %c0_13] : memref<1x128xf32, #tpu.memory_space<vmem>>, vector<1x128xf32>
    %19 = vector.broadcast %18 : vector<1x128xf32> to vector<8x128xf32>
    %20 = arith.addf %17, %19 : vector<8x128xf32>
    %c0_14 = arith.constant 0 : index
    %c0_15 = arith.constant 0 : index
    %21 = vector.load %arg6[%c0_14, %c0_15] : memref<8x128xf32, #tpu.memory_space<vmem>>, vector<8x128xf32>
    tpu.vector_store %arg6[%c0_14, %c0_15], %20 {strides = array<i32>} : memref<8x128xf32, #tpu.memory_space<vmem>>, vector<8x128xf32>,
    return
  }
  func.func @transform_0(%arg0: i32) -> (i32, i32) {
    %c0_i32 = arith.constant 0 : i32
    %c0_i32_0 = arith.constant 0 : i32
    return %arg0, %c0_i32 : i32, i32
  }
  func.func @transform_1(%arg0: i32) -> (i32, i32) {
    %c0_i32 = arith.constant 0 : i32
    %c0_i32_0 = arith.constant 0 : i32
    %c0_i32_1 = arith.constant 0 : i32
    return %c0_i32, %c0_i32_0 : i32, i32
  }
  func.func @transform_2(%arg0: i32) -> (i32, i32) {
    %c0_i32 = arith.constant 0 : i32
    %c0_i32_0 = arith.constant 0 : i32
    %c0_i32_1 = arith.constant 0 : i32
    return %c0_i32, %c0_i32_0 : i32, i32
  }
  func.func @transform_3(%arg0: i32) -> (i32, i32) {
    %c0_i32 = arith.constant 0 : i32
    %c0_i32_0 = arith.constant 0 : i32
    %c0_i32_1 = arith.constant 0 : i32
    return %c0_i32, %c0_i32_0 : i32, i32
  }
  func.func @transform_4(%arg0: i32) -> (i32, i32) {
    %c0_i32 = arith.constant 0 : i32
    %c0_i32_0 = arith.constant 0 : i32
    %c0_i32_1 = arith.constant 0 : i32
    return %c0_i32, %c0_i32_0 : i32, i32
  }
  func.func @transform_5(%arg0: i32) -> (i32, i32) {
    %c0_i32 = arith.constant 0 : i32
    %c0_i32_0 = arith.constant 0 : i32
    return %arg0, %c0_i32 : i32, i32
  }
}

</mosaic_0001>

<llo_original>
// kernel: tpu_custom_call.1
$region0: #{tpu_custom_call.1}
  #allocation0 [shape = 'u32[]', space=smem, size = 0x4, offset = 0x4, fixed_abs, tag = 'smem constant byte address 0x4 - core index']
  #allocation1 [shape = 'u32[144,128]{1,0:T(1,128)}', space=vmem, size = 0x12000, scoped, tag = 'internal scratch']
  %s0 = inlined_call_operand.hbm [shape: f32[512,128], index: 0, kind: input, shape index: {}]
  %s1 = inlined_call_operand.hbm [shape: f32[128,128], index: 1, kind: input, shape index: {}]
  %s2 = inlined_call_operand.vmem [shape: f32[1,128], index: 2, kind: input, shape index: {}]
  %s3 = inlined_call_operand.hbm [shape: f32[128,128], index: 3, kind: input, shape index: {}]
  %s4 = inlined_call_operand.vmem [shape: f32[1,128], index: 4, kind: input, shape index: {}]
  %s5 = inlined_call_operand.hbm [shape: f32[8,128], index: 5, kind: output, shape index: {}]
  %s6 = sld [smem:[#allocation0]]
  $region42: #{tpu_custom_call.1} parent=0
    _
  %s8 = ssub.s32 1, %s6
  %s9 = scalar_select 0, %s8, %s6
  $region1: #{tpu_custom_call.1} parent=0
    #allocation2 [shape = 'u8[262144]{0}', space=vmem, size = 0x40000, scoped, tag = 'input window, operand 0, single buffered']
    #allocation3 [shape = 's32[1]{0}', space=sflag, size = 0x4, scoped, tag = 'scoped memory for tpu_custom_call.1']
    #allocation4 [shape = 's32[1]{0}', space=sflag, size = 0x4, scoped, tag = 'scoped memory for tpu_custom_call.1']
    #allocation5 [shape = 'u8[65536]{0}', space=vmem, size = 0x10000, scoped, tag = 'input window, operand 1, single buffered']
    #allocation6 [shape = 's32[1]{0}', space=sflag, size = 0x4, scoped, tag = 'scoped memory for tpu_custom_call.1']
    #allocation7 [shape = 'u8[65536]{0}', space=vmem, size = 0x10000, scoped, tag = 'input window, operand 3, single buffered']
    #allocation8 [shape = 'u8[4096]{0}', space=vmem, size = 0x1000, scoped, tag = 'output window, operand 0, single buffered']
    %10 = vsyncpa [#allocation3], 0
    %11 = vsyncpa [#allocation6], 0
    %12 = vsyncpa [#allocation4], 0
    // Predicated region
    $region2: #{tpu_custom_call.1} parent=1 // pred_check
      _
    $region3: #{tpu_custom_call.1} parent=1 // pred_check_branch
      %14 = sbr.rel (0) target = $region5
    $region4: #{tpu_custom_call.1} parent=1 // pred_region
      %s16 = ssub.s32 8192, 8192
      %17 = vsyncadd [#allocation3], %s16
      %s18 = sshll.u32 [#allocation2], 4
      %s19 = int_to_ptr.vmem [resolvable:$true] %s18
      %24 = dma.hbm_to_vmem [thread:$0]  %s0, 8192, %s19, [#allocation3], 128, 128, 8
    $region5: #{tpu_custom_call.1} parent=1 // pred_fallthru
      _
    // Predicated region
    $region6: #{tpu_custom_call.1} parent=1 // pred_check
      _
    $region7: #{tpu_custom_call.1} parent=1 // pred_check_branch
      %26 = sbr.rel (0) target = $region9
    $region8: #{tpu_custom_call.1} parent=1 // pred_region
      %s28 = ssub.s32 2048, 2048
      %29 = vsyncadd [#allocation6], %s28
      %s30 = sshll.u32 [#allocation5], 4
      %s31 = int_to_ptr.vmem [resolvable:$true] %s30
      %36 = dma.hbm_to_vmem [thread:$0]  %s1, 2048, %s31, [#allocation6], 128, 128, 8
    $region9: #{tpu_custom_call.1} parent=1 // pred_fallthru
      _
    // Predicated region
    $region10: #{tpu_custom_call.1} parent=1 // pred_check
      _
    $region11: #{tpu_custom_call.1} parent=1 // pred_check_branch
      %38 = sbr.rel (0) target = $region13
    $region12: #{tpu_custom_call.1} parent=1 // pred_region
      _
    $region13: #{tpu_custom_call.1} parent=1 // pred_fallthru
      _
    // Predicated region
    $region14: #{tpu_custom_call.1} parent=1 // pred_check
      _
    $region15: #{tpu_custom_call.1} parent=1 // pred_check_branch
      %40 = sbr.rel (0) target = $region17
    $region16: #{tpu_custom_call.1} parent=1 // pred_region
      %s42 = ssub.s32 2048, 2048
      %43 = vsyncadd [#allocation6], %s42
      %s44 = sshll.u32 [#allocation7], 4
      %s45 = int_to_ptr.vmem [resolvable:$true] %s44
      %50 = dma.hbm_to_vmem [thread:$0]  %s3, 2048, %s45, [#allocation6], 128, 128, 8
    $region17: #{tpu_custom_call.1} parent=1 // pred_fallthru
      _
    // Predicated region
    $region18: #{tpu_custom_call.1} parent=1 // pred_check
      _
    $region19: #{tpu_custom_call.1} parent=1 // pred_check_branch
      %52 = sbr.rel (0) target = $region21
    $region20: #{tpu_custom_call.1} parent=1 // pred_region
      _
    $region21: #{tpu_custom_call.1} parent=1 // pred_fallthru
      _
    // Predicated region
    $region22: #{tpu_custom_call.1} parent=1 // pred_check
      _
    $region23: #{tpu_custom_call.1} parent=1 // pred_check_branch
      %54 = sbr.rel (0) target = $region25
    $region24: #{tpu_custom_call.1} parent=1 // pred_region
      %55 = dma.done [#allocation3], 8192
    $region25: #{tpu_custom_call.1} parent=1 // pred_fallthru
      _
    // Predicated region
    $region26: #{tpu_custom_call.1} parent=1 // pred_check
      _
    $region27: #{tpu_custom_call.1} parent=1 // pred_check_branch
      %57 = sbr.rel (0) target = $region29
    $region28: #{tpu_custom_call.1} parent=1 // pred_region
      %58 = dma.done [#allocation6], 2048
    $region29: #{tpu_custom_call.1} parent=1 // pred_fallthru
      _
    // Predicated region
    $region30: #{tpu_custom_call.1} parent=1 // pred_check
      _
    $region31: #{tpu_custom_call.1} parent=1 // pred_check_branch
      %60 = sbr.rel (0) target = $region33
    $region32: #{tpu_custom_call.1} parent=1 // pred_region
      %61 = dma.done [#allocation6], 2048
    $region33: #{tpu_custom_call.1} parent=1 // pred_fallthru
      _
    %v62 = vld [vmem:[#allocation2] sm:$0xff]
    %v63 = vld [vmem:[#allocation2 + $0x8] sm:$0xff]
    %v64 = vld [vmem:[#allocation2 + $0x10] sm:$0xff]
    %v65 = vld [vmem:[#allocation2 + $0x18] sm:$0xff]
    %v66 = vld [vmem:[#allocation2 + $0x20] sm:$0xff]
    %v67 = vld [vmem:[#allocation2 + $0x28] sm:$0xff]
    %v68 = vld [vmem:[#allocation2 + $0x30] sm:$0xff]
    %v69 = vld [vmem:[#allocation2 + $0x38] sm:$0xff]
    %v70 = vld [vmem:[#allocation2 + $0x40] sm:$0xff]
    %v71 = vld [vmem:[#allocation2 + $0x48] sm:$0xff]
    %v72 = vld [vmem:[#allocation2 + $0x50] sm:$0xff]
    %v73 = vld [vmem:[#allocation2 + $0x58] sm:$0xff]
    %v74 = vld [vmem:[#allocation2 + $0x60] sm:$0xff]
    %v75 = vld [vmem:[#allocation2 + $0x68] sm:$0xff]
    %v76 = vld [vmem:[#allocation2 + $0x70] sm:$0xff]
    %v77 = vld [vmem:[#allocation2 + $0x78] sm:$0xff]
    %v78 = vld [vmem:[#allocation2 + $0x80] sm:$0xff]
    %v79 = vld [vmem:[#allocation2 + $0x88] sm:$0xff]
    %v80 = vld [vmem:[#allocation2 + $0x90] sm:$0xff]
    %v81 = vld [vmem:[#allocation2 + $0x98] sm:$0xff]
    %v82 = vld [vmem:[#allocation2 + $0xa0] sm:$0xff]
    %v83 = vld [vmem:[#allocation2 + $0xa8] sm:$0xff]
    %v84 = vld [vmem:[#allocation2 + $0xb0] sm:$0xff]
    %v85 = vld [vmem:[#allocation2 + $0xb8] sm:$0xff]
    %v86 = vld [vmem:[#allocation2 + $0xc0] sm:$0xff]
    %v87 = vld [vmem:[#allocation2 + $0xc8] sm:$0xff]
    %v88 = vld [vmem:[#allocation2 + $0xd0] sm:$0xff]
    %v89 = vld [vmem:[#allocation2 + $0xd8] sm:$0xff]
    %v90 = vld [vmem:[#allocation2 + $0xe0] sm:$0xff]
    %v91 = vld [vmem:[#allocation2 + $0xe8] sm:$0xff]
    %v92 = vld [vmem:[#allocation2 + $0xf0] sm:$0xff]
    %v93 = vld [vmem:[#allocation2 + $0xf8] sm:$0xff]
    %v94 = vld [vmem:[#allocation2 + $0x100] sm:$0xff]
    %v95 = vld [vmem:[#allocation2 + $0x108] sm:$0xff]
    %v96 = vld [vmem:[#allocation2 + $0x110] sm:$0xff]
    %v97 = vld [vmem:[#allocation2 + $0x118] sm:$0xff]
    %v98 = vld [vmem:[#allocation2 + $0x120] sm:$0xff]
    %v99 = vld [vmem:[#allocation2 + $0x128] sm:$0xff]
    %v100 = vld [vmem:[#allocation2 + $0x130] sm:$0xff]
    %v101 = vld [vmem:[#allocation2 + $0x138] sm:$0xff]
    %v102 = vld [vmem:[#allocation2 + $0x140] sm:$0xff]
    %v103 = vld [vmem:[#allocation2 + $0x148] sm:$0xff]
    %v104 = vld [vmem:[#allocation2 + $0x150] sm:$0xff]
    %v105 = vld [vmem:[#allocation2 + $0x158] sm:$0xff]
    %v106 = vld [vmem:[#allocation2 + $0x160] sm:$0xff]
    %v107 = vld [vmem:[#allocation2 + $0x168] sm:$0xff]
    %v108 = vld [vmem:[#allocation2 + $0x170] sm:$0xff]
    %v109 = vld [vmem:[#allocation2 + $0x178] sm:$0xff]
    %v110 = vld [vmem:[#allocation2 + $0x180] sm:$0xff]
    %v111 = vld [vmem:[#allocation2 + $0x188] sm:$0xff]
    %v112 = vld [vmem:[#allocation2 + $0x190] sm:$0xff]
    %v113 = vld [vmem:[#allocation2 + $0x198] sm:$0xff]
    %v114 = vld [vmem:[#allocation2 + $0x1a0] sm:$0xff]
    %v115 = vld [vmem:[#allocation2 + $0x1a8] sm:$0xff]
    %v116 = vld [vmem:[#allocation2 + $0x1b0] sm:$0xff]
    %v117 = vld [vmem:[#allocation2 + $0x1b8] sm:$0xff]
    %v118 = vld [vmem:[#allocation2 + $0x1c0] sm:$0xff]
    %v119 = vld [vmem:[#allocation2 + $0x1c8] sm:$0xff]
    %v120 = vld [vmem:[#allocation2 + $0x1d0] sm:$0xff]
    %v121 = vld [vmem:[#allocation2 + $0x1d8] sm:$0xff]
    %v122 = vld [vmem:[#allocation2 + $0x1e0] sm:$0xff]
    %v123 = vld [vmem:[#allocation2 + $0x1e8] sm:$0xff]
    %v124 = vld [vmem:[#allocation2 + $0x1f0] sm:$0xff]
    %v125 = vld [vmem:[#allocation2 + $0x1f8] sm:$0xff]
    %v126 = vld [vmem:[#allocation5] sm:$0xff]
    %v127 = vld [vmem:[#allocation5 + $0x8] sm:$0xff]
    %v128 = vld [vmem:[#allocation5 + $0x10] sm:$0xff]
    %v129 = vld [vmem:[#allocation5 + $0x18] sm:$0xff]
    %v130 = vld [vmem:[#allocation5 + $0x20] sm:$0xff]
    %v131 = vld [vmem:[#allocation5 + $0x28] sm:$0xff]
    %v132 = vld [vmem:[#allocation5 + $0x30] sm:$0xff]
    %v133 = vld [vmem:[#allocation5 + $0x38] sm:$0xff]
    %v134 = vld [vmem:[#allocation5 + $0x40] sm:$0xff]
    %v135 = vld [vmem:[#allocation5 + $0x48] sm:$0xff]
    %v136 = vld [vmem:[#allocation5 + $0x50] sm:$0xff]
    %v137 = vld [vmem:[#allocation5 + $0x58] sm:$0xff]
    %v138 = vld [vmem:[#allocation5 + $0x60] sm:$0xff]
    %v139 = vld [vmem:[#allocation5 + $0x68] sm:$0xff]
    %v140 = vld [vmem:[#allocation5 + $0x70] sm:$0xff]
    %v141 = vld [vmem:[#allocation5 + $0x78] sm:$0xff]
    %v142 = vld [vmem:[%s2] sm:$0x1]
    %v144 = vlaneseq
    %v145 = vshrl.u32 %v144, 7
    %v146 = vsub.s32 0, %v145
    %v147 = vrot.slane %v142, %v146
    %149 = vmatprep.subr.mxu0 0.0
    %150 = vmatpush1.msra.mxu0 %v141
    %151 = vmatprep.subr.mxu0 0.0
    %152 = vmatpush1.msra.mxu0 %v140
    %153 = vmatprep.subr.mxu0 0.0
    %154 = vmatpush1.msra.mxu0 %v139
    %155 = vmatprep.subr.mxu0 0.0
    %156 = vmatpush1.msra.mxu0 %v138
    %157 = vmatprep.subr.mxu0 0.0
    %158 = vmatpush1.msra.mxu0 %v137
    %159 = vmatprep.subr.mxu0 0.0
    %160 = vmatpush1.msra.mxu0 %v136
    %161 = vmatprep.subr.mxu0 0.0
    %162 = vmatpush1.msra.mxu0 %v135
    %163 = vmatprep.subr.mxu0 0.0
    %164 = vmatpush1.msra.mxu0 %v134
    %165 = vmatprep.subr.mxu0 0.0
    %166 = vmatpush1.msra.mxu0 %v133
    %167 = vmatprep.subr.mxu0 0.0
    %168 = vmatpush1.msra.mxu0 %v132
    %169 = vmatprep.subr.mxu0 0.0
    %170 = vmatpush1.msra.mxu0 %v131
    %171 = vmatprep.subr.mxu0 0.0
    %172 = vmatpush1.msra.mxu0 %v130
    %173 = vmatprep.subr.mxu0 0.0
    %174 = vmatpush1.msra.mxu0 %v129
    %175 = vmatprep.subr.mxu0 0.0
    %176 = vmatpush1.msra.mxu0 %v128
    %177 = vmatprep.subr.mxu0 0.0
    %178 = vmatpush1.msra.mxu0 %v127
    %179 = vmatprep.subr.mxu0 0.0
    %180 = vmatpush1.msra.mxu0 %v126
    %181 = vmatprep.subr.mxu0 0.0
    %182 = vmatpush2.msra.mxu0 0.0
    %183 = vmatprep.subr.mxu0 0.0
    %184 = vmatpush2.msra.mxu0 0.0
    %185 = vmatprep.subr.mxu0 0.0
    %186 = vmatpush2.msra.mxu0 0.0
    %187 = vmatprep.subr.mxu0 0.0
    %188 = vmatpush2.msra.mxu0 0.0
    %189 = vmatprep.subr.mxu0 0.0
    %190 = vmatpush2.msra.mxu0 0.0
    %191 = vmatprep.subr.mxu0 0.0
    %192 = vmatpush2.msra.mxu0 0.0
    %193 = vmatprep.subr.mxu0 0.0
    %194 = vmatpush2.msra.mxu0 0.0
    %195 = vmatprep.subr.mxu0 0.0
    %196 = vmatpush2.msra.mxu0 0.0
    %197 = vmatprep.subr.mxu0 0.0
    %198 = vmatpush2.msra.mxu0 0.0
    %199 = vmatprep.subr.mxu0 0.0
    %200 = vmatpush2.msra.mxu0 0.0
    %201 = vmatprep.subr.mxu0 0.0
    %202 = vmatpush2.msra.mxu0 0.0
    %203 = vmatprep.subr.mxu0 0.0
    %204 = vmatpush2.msra.mxu0 0.0
    %205 = vmatprep.subr.mxu0 0.0
    %206 = vmatpush2.msra.mxu0 0.0
    %207 = vmatprep.subr.mxu0 0.0
    %208 = vmatpush2.msra.mxu0 0.0
    %209 = vmatprep.subr.mxu0 0.0
    %210 = vmatpush2.msra.mxu0 0.0
    %211 = vmatprep.subr.mxu0 0.0
    %212 = vmatpush2.msra.mxu0 0.0
    %213 = vmatprep.mubr.f32.mxu0 0.0
    %214 = vmatmul.mubr.f32.gmra.mxu0 %v62
    %v215 = vpop.f32.mrf.mxu0
    %v216 = vadd.f32 %v147, %v215
    %v217 = vpop.f32.mrf.mxu0
    %218 = vmatprep.mubr.f32.mxu0 0.0
    %219 = vmatmul.mubr.f32.gmra.mxu0 %v63
    %v220 = vpop.f32.mrf.mxu0
    %v221 = vadd.f32 %v147, %v220
    %v222 = vpop.f32.mrf.mxu0
    %223 = vmatprep.mubr.f32.mxu0 0.0
    %224 = vmatmul.mubr.f32.gmra.mxu0 %v64
    %v225 = vpop.f32.mrf.mxu0
    %v226 = vadd.f32 %v147, %v225
    %v227 = vpop.f32.mrf.mxu0
    %228 = vmatprep.mubr.f32.mxu0 0.0
    %229 = vmatmul.mubr.f32.gmra.mxu0 %v65
    %v230 = vpop.f32.mrf.mxu0
    %v231 = vadd.f32 %v147, %v230
    %v232 = vpop.f32.mrf.mxu0
    %233 = vmatprep.mubr.f32.mxu0 0.0
    %234 = vmatmul.mubr.f32.gmra.mxu0 %v66
    %v235 = vpop.f32.mrf.mxu0
    %v236 = vadd.f32 %v147, %v235
    %v237 = vpop.f32.mrf.mxu0
    %238 = vmatprep.mubr.f32.mxu0 0.0
    %239 = vmatmul.mubr.f32.gmra.mxu0 %v67
    %v240 = vpop.f32.mrf.mxu0
    %v241 = vadd.f32 %v147, %v240
    %v242 = vpop.f32.mrf.mxu0
    %243 = vmatprep.mubr.f32.mxu0 0.0
    %244 = vmatmul.mubr.f32.gmra.mxu0 %v68
    %v245 = vpop.f32.mrf.mxu0
    %v246 = vadd.f32 %v147, %v245
    %v247 = vpop.f32.mrf.mxu0
    %248 = vmatprep.mubr.f32.mxu0 0.0
    %249 = vmatmul.mubr.f32.gmra.mxu0 %v69
    %v250 = vpop.f32.mrf.mxu0
    %v251 = vadd.f32 %v147, %v250
    %v252 = vpop.f32.mrf.mxu0
    %253 = vmatprep.mubr.f32.mxu0 0.0
    %254 = vmatmul.mubr.f32.gmra.mxu0 %v70
    %v255 = vpop.f32.mrf.mxu0
    %v256 = vadd.f32 %v147, %v255
    %v257 = vpop.f32.mrf.mxu0
    %258 = vmatprep.mubr.f32.mxu0 0.0
    %259 = vmatmul.mubr.f32.gmra.mxu0 %v71
    %v260 = vpop.f32.mrf.mxu0
    %v261 = vadd.f32 %v147, %v260
    %v262 = vpop.f32.mrf.mxu0
    %263 = vmatprep.mubr.f32.mxu0 0.0
    %264 = vmatmul.mubr.f32.gmra.mxu0 %v72
    %v265 = vpop.f32.mrf.mxu0
    %v266 = vadd.f32 %v147, %v265
    %v267 = vpop.f32.mrf.mxu0
    %268 = vmatprep.mubr.f32.mxu0 0.0
    %269 = vmatmul.mubr.f32.gmra.mxu0 %v73
    %v270 = vpop.f32.mrf.mxu0
    %v271 = vadd.f32 %v147, %v270
    %v272 = vpop.f32.mrf.mxu0
    %273 = vmatprep.mubr.f32.mxu0 0.0
    %274 = vmatmul.mubr.f32.gmra.mxu0 %v74
    %v275 = vpop.f32.mrf.mxu0
    %v276 = vadd.f32 %v147, %v275
    %v277 = vpop.f32.mrf.mxu0
    %278 = vmatprep.mubr.f32.mxu0 0.0
    %279 = vmatmul.mubr.f32.gmra.mxu0 %v75
    %v280 = vpop.f32.mrf.mxu0
    %v281 = vadd.f32 %v147, %v280
    %v282 = vpop.f32.mrf.mxu0
    %283 = vmatprep.mubr.f32.mxu0 0.0
    %284 = vmatmul.mubr.f32.gmra.mxu0 %v76
    %v285 = vpop.f32.mrf.mxu0
    %v286 = vadd.f32 %v147, %v285
    %v287 = vpop.f32.mrf.mxu0
    %288 = vmatprep.mubr.f32.mxu0 0.0
    %289 = vmatmul.mubr.f32.gmra.mxu0 %v77
    %v290 = vpop.f32.mrf.mxu0
    %v291 = vadd.f32 %v147, %v290
    %v292 = vpop.f32.mrf.mxu0
    %293 = vmatprep.mubr.f32.mxu0 0.0
    %294 = vmatmul.mubr.f32.gmra.mxu0 %v78
    %v295 = vpop.f32.mrf.mxu0
    %v296 = vadd.f32 %v147, %v295
    %v297 = vpop.f32.mrf.mxu0
    %298 = vmatprep.mubr.f32.mxu0 0.0
    %299 = vmatmul.mubr.f32.gmra.mxu0 %v79
    %v300 = vpop.f32.mrf.mxu0
    %v301 = vadd.f32 %v147, %v300
    %v302 = vpop.f32.mrf.mxu0
    %303 = vmatprep.mubr.f32.mxu0 0.0
    %304 = vmatmul.mubr.f32.gmra.mxu0 %v80
    %v305 = vpop.f32.mrf.mxu0
    %v306 = vadd.f32 %v147, %v305
    %v307 = vpop.f32.mrf.mxu0
    %308 = vmatprep.mubr.f32.mxu0 0.0
    %309 = vmatmul.mubr.f32.gmra.mxu0 %v81
    %v310 = vpop.f32.mrf.mxu0
    %v311 = vadd.f32 %v147, %v310
    %v312 = vpop.f32.mrf.mxu0
    %313 = vmatprep.mubr.f32.mxu0 0.0
    %314 = vmatmul.mubr.f32.gmra.mxu0 %v82
    %v315 = vpop.f32.mrf.mxu0
    %v316 = vadd.f32 %v147, %v315
    %v317 = vpop.f32.mrf.mxu0
    %318 = vmatprep.mubr.f32.mxu0 0.0
    %319 = vmatmul.mubr.f32.gmra.mxu0 %v83
    %v320 = vpop.f32.mrf.mxu0
    %v321 = vadd.f32 %v147, %v320
    %v322 = vpop.f32.mrf.mxu0
    %323 = vmatprep.mubr.f32.mxu0 0.0
    %324 = vmatmul.mubr.f32.gmra.mxu0 %v84
    %v325 = vpop.f32.mrf.mxu0
    %v326 = vadd.f32 %v147, %v325
    %v327 = vpop.f32.mrf.mxu0
    %328 = vmatprep.mubr.f32.mxu0 0.0
    %329 = vmatmul.mubr.f32.gmra.mxu0 %v85
    %v330 = vpop.f32.mrf.mxu0
    %v331 = vadd.f32 %v147, %v330
    %v332 = vpop.f32.mrf.mxu0
    %333 = vmatprep.mubr.f32.mxu0 0.0
    %334 = vmatmul.mubr.f32.gmra.mxu0 %v86
    %v335 = vpop.f32.mrf.mxu0
    %v336 = vadd.f32 %v147, %v335
    %v337 = vpop.f32.mrf.mxu0
    %338 = vmatprep.mubr.f32.mxu0 0.0
    %339 = vmatmul.mubr.f32.gmra.mxu0 %v87
    %v340 = vpop.f32.mrf.mxu0
    %v341 = vadd.f32 %v147, %v340
    %v342 = vpop.f32.mrf.mxu0
    %343 = vmatprep.mubr.f32.mxu0 0.0
    %344 = vmatmul.mubr.f32.gmra.mxu0 %v88
    %v345 = vpop.f32.mrf.mxu0
    %v346 = vadd.f32 %v147, %v345
    %v347 = vpop.f32.mrf.mxu0
    %348 = vmatprep.mubr.f32.mxu0 0.0
    %349 = vmatmul.mubr.f32.gmra.mxu0 %v89
    %v350 = vpop.f32.mrf.mxu0
    %v351 = vadd.f32 %v147, %v350
    %v352 = vpop.f32.mrf.mxu0
    %353 = vmatprep.mubr.f32.mxu0 0.0
    %354 = vmatmul.mubr.f32.gmra.mxu0 %v90
    %v355 = vpop.f32.mrf.mxu0
    %v356 = vadd.f32 %v147, %v355
    %v357 = vpop.f32.mrf.mxu0
    %358 = vmatprep.mubr.f32.mxu0 0.0
    %359 = vmatmul.mubr.f32.gmra.mxu0 %v91
    %v360 = vpop.f32.mrf.mxu0
    %v361 = vadd.f32 %v147, %v360
    %v362 = vpop.f32.mrf.mxu0
    %363 = vmatprep.mubr.f32.mxu0 0.0
    %364 = vmatmul.mubr.f32.gmra.mxu0 %v92
    %v365 = vpop.f32.mrf.mxu0
    %v366 = vadd.f32 %v147, %v365
    %v367 = vpop.f32.mrf.mxu0
    %368 = vmatprep.mubr.f32.mxu0 0.0
    %369 = vmatmul.mubr.f32.gmra.mxu0 %v93
    %v370 = vpop.f32.mrf.mxu0
    %v371 = vadd.f32 %v147, %v370
    %v372 = vpop.f32.mrf.mxu0
    %373 = vmatprep.mubr.f32.mxu0 0.0
    %374 = vmatmul.mubr.f32.gmra.mxu0 %v94
    %v375 = vpop.f32.mrf.mxu0
    %v376 = vadd.f32 %v147, %v375
    %v377 = vpop.f32.mrf.mxu0
    %378 = vmatprep.mubr.f32.mxu0 0.0
    %379 = vmatmul.mubr.f32.gmra.mxu0 %v95
    %v380 = vpop.f32.mrf.mxu0
    %v381 = vadd.f32 %v147, %v380
    %v382 = vpop.f32.mrf.mxu0
    %383 = vmatprep.mubr.f32.mxu0 0.0
    %384 = vmatmul.mubr.f32.gmra.mxu0 %v96
    %v385 = vpop.f32.mrf.mxu0
    %v386 = vadd.f32 %v147, %v385
    %v387 = vpop.f32.mrf.mxu0
    %388 = vmatprep.mubr.f32.mxu0 0.0
    %389 = vmatmul.mubr.f32.gmra.mxu0 %v97
    %v390 = vpop.f32.mrf.mxu0
    %v391 = vadd.f32 %v147, %v390
    %v392 = vpop.f32.mrf.mxu0
    %393 = vmatprep.mubr.f32.mxu0 0.0
    %394 = vmatmul.mubr.f32.gmra.mxu0 %v98
    %v395 = vpop.f32.mrf.mxu0
    %v396 = vadd.f32 %v147, %v395
    %v397 = vpop.f32.mrf.mxu0
    %398 = vmatprep.mubr.f32.mxu0 0.0
    %399 = vmatmul.mubr.f32.gmra.mxu0 %v99
    %v400 = vpop.f32.mrf.mxu0
    %v401 = vadd.f32 %v147, %v400
    %v402 = vpop.f32.mrf.mxu0
    %403 = vmatprep.mubr.f32.mxu0 0.0
    %404 = vmatmul.mubr.f32.gmra.mxu0 %v100
    %v405 = vpop.f32.mrf.mxu0
    %v406 = vadd.f32 %v147, %v405
    %v407 = vpop.f32.mrf.mxu0
    %408 = vmatprep.mubr.f32.mxu0 0.0
    %409 = vmatmul.mubr.f32.gmra.mxu0 %v101
    %v410 = vpop.f32.mrf.mxu0
    %v411 = vadd.f32 %v147, %v410
    %v412 = vpop.f32.mrf.mxu0
    %413 = vmatprep.mubr.f32.mxu0 0.0
    %414 = vmatmul.mubr.f32.gmra.mxu0 %v102
    %v415 = vpop.f32.mrf.mxu0
    %v416 = vadd.f32 %v147, %v415
    %v417 = vpop.f32.mrf.mxu0
    %418 = vmatprep.mubr.f32.mxu0 0.0
    %419 = vmatmul.mubr.f32.gmra.mxu0 %v103
    %v420 = vpop.f32.mrf.mxu0
    %v421 = vadd.f32 %v147, %v420
    %v422 = vpop.f32.mrf.mxu0
    %423 = vmatprep.mubr.f32.mxu0 0.0
    %424 = vmatmul.mubr.f32.gmra.mxu0 %v104
    %v425 = vpop.f32.mrf.mxu0
    %v426 = vadd.f32 %v147, %v425
    %v427 = vpop.f32.mrf.mxu0
    %428 = vmatprep.mubr.f32.mxu0 0.0
    %429 = vmatmul.mubr.f32.gmra.mxu0 %v105
    %v430 = vpop.f32.mrf.mxu0
    %v431 = vadd.f32 %v147, %v430
    %v432 = vpop.f32.mrf.mxu0
    %433 = vmatprep.mubr.f32.mxu0 0.0
    %434 = vmatmul.mubr.f32.gmra.mxu0 %v106
    %v435 = vpop.f32.mrf.mxu0
    %v436 = vadd.f32 %v147, %v435
    %v437 = vpop.f32.mrf.mxu0
    %438 = vmatprep.mubr.f32.mxu0 0.0
    %439 = vmatmul.mubr.f32.gmra.mxu0 %v107
    %v440 = vpop.f32.mrf.mxu0
    %v441 = vadd.f32 %v147, %v440
    %v442 = vpop.f32.mrf.mxu0
    %443 = vmatprep.mubr.f32.mxu0 0.0
    %444 = vmatmul.mubr.f32.gmra.mxu0 %v108
    %v445 = vpop.f32.mrf.mxu0
    %v446 = vadd.f32 %v147, %v445
    %v447 = vpop.f32.mrf.mxu0
    %448 = vmatprep.mubr.f32.mxu0 0.0
    %449 = vmatmul.mubr.f32.gmra.mxu0 %v109
    %v450 = vpop.f32.mrf.mxu0
    %v451 = vadd.f32 %v147, %v450
    %v452 = vpop.f32.mrf.mxu0
    %453 = vmatprep.mubr.f32.mxu0 0.0
    %454 = vmatmul.mubr.f32.gmra.mxu0 %v110
    %v455 = vpop.f32.mrf.mxu0
    %v456 = vadd.f32 %v147, %v455
    %v457 = vpop.f32.mrf.mxu0
    %458 = vmatprep.mubr.f32.mxu0 0.0
    %459 = vmatmul.mubr.f32.gmra.mxu0 %v111
    %v460 = vpop.f32.mrf.mxu0
    %v461 = vadd.f32 %v147, %v460
    %v462 = vpop.f32.mrf.mxu0
    %463 = vmatprep.mubr.f32.mxu0 0.0
    %464 = vmatmul.mubr.f32.gmra.mxu0 %v112
    %v465 = vpop.f32.mrf.mxu0
    %v466 = vadd.f32 %v147, %v465
    %v467 = vpop.f32.mrf.mxu0
    %468 = vmatprep.mubr.f32.mxu0 0.0
    %469 = vmatmul.mubr.f32.gmra.mxu0 %v113
    %v470 = vpop.f32.mrf.mxu0
    %v471 = vadd.f32 %v147, %v470
    %v472 = vpop.f32.mrf.mxu0
    %473 = vmatprep.mubr.f32.mxu0 0.0
    %474 = vmatmul.mubr.f32.gmra.mxu0 %v114
    %v475 = vpop.f32.mrf.mxu0
    %v476 = vadd.f32 %v147, %v475
    %v477 = vpop.f32.mrf.mxu0
    %478 = vmatprep.mubr.f32.mxu0 0.0
    %479 = vmatmul.mubr.f32.gmra.mxu0 %v115
    %v480 = vpop.f32.mrf.mxu0
    %v481 = vadd.f32 %v147, %v480
    %v482 = vpop.f32.mrf.mxu0
    %483 = vmatprep.mubr.f32.mxu0 0.0
    %484 = vmatmul.mubr.f32.gmra.mxu0 %v116
    %v485 = vpop.f32.mrf.mxu0
    %v486 = vadd.f32 %v147, %v485
    %v487 = vpop.f32.mrf.mxu0
    %488 = vmatprep.mubr.f32.mxu0 0.0
    %489 = vmatmul.mubr.f32.gmra.mxu0 %v117
    %v490 = vpop.f32.mrf.mxu0
    %v491 = vadd.f32 %v147, %v490
    %v492 = vpop.f32.mrf.mxu0
    %493 = vmatprep.mubr.f32.mxu0 0.0
    %494 = vmatmul.mubr.f32.gmra.mxu0 %v118
    %v495 = vpop.f32.mrf.mxu0
    %v496 = vadd.f32 %v147, %v495
    %v497 = vpop.f32.mrf.mxu0
    %498 = vmatprep.mubr.f32.mxu0 0.0
    %499 = vmatmul.mubr.f32.gmra.mxu0 %v119
    %v500 = vpop.f32.mrf.mxu0
    %v501 = vadd.f32 %v147, %v500
    %v502 = vpop.f32.mrf.mxu0
    %503 = vmatprep.mubr.f32.mxu0 0.0
    %504 = vmatmul.mubr.f32.gmra.mxu0 %v120
    %v505 = vpop.f32.mrf.mxu0
    %v506 = vadd.f32 %v147, %v505
    %v507 = vpop.f32.mrf.mxu0
    %508 = vmatprep.mubr.f32.mxu0 0.0
    %509 = vmatmul.mubr.f32.gmra.mxu0 %v121
    %v510 = vpop.f32.mrf.mxu0
    %v511 = vadd.f32 %v147, %v510
    %v512 = vpop.f32.mrf.mxu0
    %513 = vmatprep.mubr.f32.mxu0 0.0
    %514 = vmatmul.mubr.f32.gmra.mxu0 %v122
    %v515 = vpop.f32.mrf.mxu0
    %v516 = vadd.f32 %v147, %v515
    %v517 = vpop.f32.mrf.mxu0
    %518 = vmatprep.mubr.f32.mxu0 0.0
    %519 = vmatmul.mubr.f32.gmra.mxu0 %v123
    %v520 = vpop.f32.mrf.mxu0
    %v521 = vadd.f32 %v147, %v520
    %v522 = vpop.f32.mrf.mxu0
    %523 = vmatprep.mubr.f32.mxu0 0.0
    %524 = vmatmul.mubr.f32.gmra.mxu0 %v124
    %v525 = vpop.f32.mrf.mxu0
    %v526 = vadd.f32 %v147, %v525
    %v527 = vpop.f32.mrf.mxu0
    %528 = vmatprep.mubr.f32.mxu0 0.0
    %529 = vmatmul.mubr.f32.gmra.mxu0 %v125
    %v530 = vpop.f32.mrf.mxu0
    %v531 = vadd.f32 %v147, %v530
    %v532 = vpop.f32.mrf.mxu0
    %533 = vdwg.mxu0
    %v534 = vmax.f32 %v216, 0.0
    %v535 = vmax.f32 %v221, 0.0
    %v536 = vmax.f32 %v226, 0.0
    %v537 = vmax.f32 %v231, 0.0
    %v538 = vmax.f32 %v236, 0.0
    %v539 = vmax.f32 %v241, 0.0
    %v540 = vmax.f32 %v246, 0.0
    %v541 = vmax.f32 %v251, 0.0
    %v542 = vmax.f32 %v256, 0.0
    %v543 = vmax.f32 %v261, 0.0
    %v544 = vmax.f32 %v266, 0.0
    %v545 = vmax.f32 %v271, 0.0
    %v546 = vmax.f32 %v276, 0.0
    %v547 = vmax.f32 %v281, 0.0
    %v548 = vmax.f32 %v286, 0.0
    %v549 = vmax.f32 %v291, 0.0
    %v550 = vmax.f32 %v296, 0.0
    %v551 = vmax.f32 %v301, 0.0
    %v552 = vmax.f32 %v306, 0.0
    %v553 = vmax.f32 %v311, 0.0
    %v554 = vmax.f32 %v316, 0.0
    %v555 = vmax.f32 %v321, 0.0
    %v556 = vmax.f32 %v326, 0.0
    %v557 = vmax.f32 %v331, 0.0
    %v558 = vmax.f32 %v336, 0.0
    %v559 = vmax.f32 %v341, 0.0
    %v560 = vmax.f32 %v346, 0.0
    %v561 = vmax.f32 %v351, 0.0
    %v562 = vmax.f32 %v356, 0.0
    %v563 = vmax.f32 %v361, 0.0
    %v564 = vmax.f32 %v366, 0.0
    %v565 = vmax.f32 %v371, 0.0
    %v566 = vmax.f32 %v376, 0.0
    %v567 = vmax.f32 %v381, 0.0
    %v568 = vmax.f32 %v386, 0.0
    %v569 = vmax.f32 %v391, 0.0
    %v570 = vmax.f32 %v396, 0.0
    %v571 = vmax.f32 %v401, 0.0
    %v572 = vmax.f32 %v406, 0.0
    %v573 = vmax.f32 %v411, 0.0
    %v574 = vmax.f32 %v416, 0.0
    %v575 = vmax.f32 %v421, 0.0
    %v576 = vmax.f32 %v426, 0.0
    %v577 = vmax.f32 %v431, 0.0
    %v578 = vmax.f32 %v436, 0.0
    %v579 = vmax.f32 %v441, 0.0
    %v580 = vmax.f32 %v446, 0.0
    %v581 = vmax.f32 %v451, 0.0
    %v582 = vmax.f32 %v456, 0.0
    %v583 = vmax.f32 %v461, 0.0
    %v584 = vmax.f32 %v466, 0.0
    %v585 = vmax.f32 %v471, 0.0
    %v586 = vmax.f32 %v476, 0.0
    %v587 = vmax.f32 %v481, 0.0
    %v588 = vmax.f32 %v486, 0.0
    %v589 = vmax.f32 %v491, 0.0
    %v590 = vmax.f32 %v496, 0.0
    %v591 = vmax.f32 %v501, 0.0
    %v592 = vmax.f32 %v506, 0.0
    %v593 = vmax.f32 %v511, 0.0
    %v594 = vmax.f32 %v516, 0.0
    %v595 = vmax.f32 %v521, 0.0
    %v596 = vmax.f32 %v526, 0.0
    %v597 = vmax.f32 %v531, 0.0
    %v598 = vadd.f32 %v534, %v535
    %v599 = vadd.f32 %v598, %v536
    %v600 = vadd.f32 %v599, %v537
    %v601 = vadd.f32 %v600, %v538
    %v602 = vadd.f32 %v601, %v539
    %v603 = vadd.f32 %v602, %v540
    %v604 = vadd.f32 %v603, %v541
    %v605 = vadd.f32 %v604, %v542
    %v606 = vadd.f32 %v605, %v543
    %v607 = vadd.f32 %v606, %v544
    %v608 = vadd.f32 %v607, %v545
    %v609 = vadd.f32 %v608, %v546
    %v610 = vadd.f32 %v609, %v547
    %v611 = vadd.f32 %v610, %v548
    %v612 = vadd.f32 %v611, %v549
    %v613 = vadd.f32 %v612, %v550
    %v614 = vadd.f32 %v613, %v551
    %v615 = vadd.f32 %v614, %v552
    %v616 = vadd.f32 %v615, %v553
    %v617 = vadd.f32 %v616, %v554
    %v618 = vadd.f32 %v617, %v555
    %v619 = vadd.f32 %v618, %v556
    %v620 = vadd.f32 %v619, %v557
    %v621 = vadd.f32 %v620, %v558
    %v622 = vadd.f32 %v621, %v559
    %v623 = vadd.f32 %v622, %v560
    %v624 = vadd.f32 %v623, %v561
    %v625 = vadd.f32 %v624, %v562
    %v626 = vadd.f32 %v625, %v563
    %v627 = vadd.f32 %v626, %v564
    %v628 = vadd.f32 %v627, %v565
    %v629 = vrot.slane %v628, 4
    %v630 = vadd.f32 %v628, %v629
    %v631 = vrot.slane %v630, 2
    %v632 = vadd.f32 %v630, %v631
    %v633 = vrot.slane %v632, 1
    %v634 = vadd.f32 %v632, %v633
    %v635 = vadd.f32 %v566, %v567
    %v636 = vadd.f32 %v635, %v568
    %v637 = vadd.f32 %v636, %v569
    %v638 = vadd.f32 %v637, %v570
    %v639 = vadd.f32 %v638, %v571
    %v640 = vadd.f32 %v639, %v572
    %v641 = vadd.f32 %v640, %v573
    %v642 = vadd.f32 %v641, %v574
    %v643 = vadd.f32 %v642, %v575
    %v644 = vadd.f32 %v643, %v576
    %v645 = vadd.f32 %v644, %v577
    %v646 = vadd.f32 %v645, %v578
    %v647 = vadd.f32 %v646, %v579
    %v648 = vadd.f32 %v647, %v580
    %v649 = vadd.f32 %v648, %v581
    %v650 = vadd.f32 %v649, %v582
    %v651 = vadd.f32 %v650, %v583
    %v652 = vadd.f32 %v651, %v584
    %v653 = vadd.f32 %v652, %v585
    %v654 = vadd.f32 %v653, %v586
    %v655 = vadd.f32 %v654, %v587
    %v656 = vadd.f32 %v655, %v588
    %v657 = vadd.f32 %v656, %v589
    %v658 = vadd.f32 %v657, %v590
    %v659 = vadd.f32 %v658, %v591
    %v660 = vadd.f32 %v659, %v592
    %v661 = vadd.f32 %v660, %v593
    %v662 = vadd.f32 %v661, %v594
    %v663 = vadd.f32 %v662, %v595
    %v664 = vadd.f32 %v663, %v596
    %v665 = vadd.f32 %v664, %v597
    %v666 = vrot.slane %v665, 4
    %v667 = vadd.f32 %v665, %v666
    %v668 = vrot.slane %v667, 2
    %v669 = vadd.f32 %v667, %v668
    %v670 = vrot.slane %v669, 1
    %v671 = vadd.f32 %v669, %v670
    %vm672 = vcmask 1040384
    %v673 = vsel %vm672, %v634, %v671
    %vm674 = vcmask 1041408
    %v675 = vsel %vm674, %v673, 0.0
    %v676 = vld [vmem:[#allocation7] sm:$0xff]
    %v677 = vld [vmem:[#allocation7 + $0x8] sm:$0xff]
    %v678 = vld [vmem:[#allocation7 + $0x10] sm:$0xff]
    %v679 = vld [vmem:[#allocation7 + $0x18] sm:$0xff]
    %v680 = vld [vmem:[#allocation7 + $0x20] sm:$0xff]
    %v681 = vld [vmem:[#allocation7 + $0x28] sm:$0xff]
    %v682 = vld [vmem:[#allocation7 + $0x30] sm:$0xff]
    %v683 = vld [vmem:[#allocation7 + $0x38] sm:$0xff]
    %v684 = vld [vmem:[#allocation7 + $0x40] sm:$0xff]
    %v685 = vld [vmem:[#allocation7 + $0x48] sm:$0xff]
    %v686 = vld [vmem:[#allocation7 + $0x50] sm:$0xff]
    %v687 = vld [vmem:[#allocation7 + $0x58] sm:$0xff]
    %v688 = vld [vmem:[#allocation7 + $0x60] sm:$0xff]
    %v689 = vld [vmem:[#allocation7 + $0x68] sm:$0xff]
    %v690 = vld [vmem:[#allocation7 + $0x70] sm:$0xff]
    %v691 = vld [vmem:[#allocation7 + $0x78] sm:$0xff]
    %v692 = vld [vmem:[%s4] sm:$0x1]
    %v694 = vlaneseq
    %v695 = vshrl.u32 %v694, 7
    %v696 = vsub.s32 0, %v695
    %v697 = vrot.slane %v692, %v696
    %699 = vmatprep.subr.mxu0 0.0
    %700 = vmatpush1.msra.mxu0 %v691
    %701 = vmatprep.subr.mxu0 0.0
    %702 = vmatpush1.msra.mxu0 %v690
    %703 = vmatprep.subr.mxu0 0.0
    %704 = vmatpush1.msra.mxu0 %v689
    %705 = vmatprep.subr.mxu0 0.0
    %706 = vmatpush1.msra.mxu0 %v688
    %707 = vmatprep.subr.mxu0 0.0
    %708 = vmatpush1.msra.mxu0 %v687
    %709 = vmatprep.subr.mxu0 0.0
    %710 = vmatpush1.msra.mxu0 %v686
    %711 = vmatprep.subr.mxu0 0.0
    %712 = vmatpush1.msra.mxu0 %v685
    %713 = vmatprep.subr.mxu0 0.0
    %714 = vmatpush1.msra.mxu0 %v684
    %715 = vmatprep.subr.mxu0 0.0
    %716 = vmatpush1.msra.mxu0 %v683
    %717 = vmatprep.subr.mxu0 0.0
    %718 = vmatpush1.msra.mxu0 %v682
    %719 = vmatprep.subr.mxu0 0.0
    %720 = vmatpush1.msra.mxu0 %v681
    %721 = vmatprep.subr.mxu0 0.0
    %722 = vmatpush1.msra.mxu0 %v680
    %723 = vmatprep.subr.mxu0 0.0
    %724 = vmatpush1.msra.mxu0 %v679
    %725 = vmatprep.subr.mxu0 0.0
    %726 = vmatpush1.msra.mxu0 %v678
    %727 = vmatprep.subr.mxu0 0.0
    %728 = vmatpush1.msra.mxu0 %v677
    %729 = vmatprep.subr.mxu0 0.0
    %730 = vmatpush1.msra.mxu0 %v676
    %731 = vmatprep.subr.mxu0 0.0
    %732 = vmatpush2.msra.mxu0 0.0
    %733 = vmatprep.subr.mxu0 0.0
    %734 = vmatpush2.msra.mxu0 0.0
    %735 = vmatprep.subr.mxu0 0.0
    %736 = vmatpush2.msra.mxu0 0.0
    %737 = vmatprep.subr.mxu0 0.0
    %738 = vmatpush2.msra.mxu0 0.0
    %739 = vmatprep.subr.mxu0 0.0
    %740 = vmatpush2.msra.mxu0 0.0
    %741 = vmatprep.subr.mxu0 0.0
    %742 = vmatpush2.msra.mxu0 0.0
    %743 = vmatprep.subr.mxu0 0.0
    %744 = vmatpush2.msra.mxu0 0.0
    %745 = vmatprep.subr.mxu0 0.0
    %746 = vmatpush2.msra.mxu0 0.0
    %747 = vmatprep.subr.mxu0 0.0
    %748 = vmatpush2.msra.mxu0 0.0
    %749 = vmatprep.subr.mxu0 0.0
    %750 = vmatpush2.msra.mxu0 0.0
    %751 = vmatprep.subr.mxu0 0.0
    %752 = vmatpush2.msra.mxu0 0.0
    %753 = vmatprep.subr.mxu0 0.0
    %754 = vmatpush2.msra.mxu0 0.0
    %755 = vmatprep.subr.mxu0 0.0
    %756 = vmatpush2.msra.mxu0 0.0
    %757 = vmatprep.subr.mxu0 0.0
    %758 = vmatpush2.msra.mxu0 0.0
    %759 = vmatprep.subr.mxu0 0.0
    %760 = vmatpush2.msra.mxu0 0.0
    %761 = vmatprep.subr.mxu0 0.0
    %762 = vmatpush2.msra.mxu0 0.0
    %763 = vmatprep.mubr.f32.mxu0 0.0
    %764 = vmatmul.mubr.f32.gmra.mxu0 %v675
    %v765 = vpop.f32.mrf.mxu0
    %v766 = vadd.f32 %v697, %v765
    %v767 = vpop.f32.mrf.mxu0
    %768 = vdwg.mxu0
    %769 = vst [vmem:[#allocation8] sm:$0xff] %v766
    // Predicated region
    $region34: #{tpu_custom_call.1} parent=1 // pred_check
      _
    $region35: #{tpu_custom_call.1} parent=1 // pred_check_branch
      %771 = sbr.rel (0) target = $region37
    $region36: #{tpu_custom_call.1} parent=1 // pred_region
      %s773 = ssub.s32 128, 128
      %774 = vsyncadd [#allocation4], %s773
      %s776 = sshll.u32 [#allocation8], 4
      %s777 = int_to_ptr.vmem [resolvable:$true] %s776
      %779 = dma.vmem_to_hbm [thread:$0]  %s777, 128, %s5, [#allocation4]
    $region37: #{tpu_custom_call.1} parent=1 // pred_fallthru
      _
    // Predicated region
    $region38: #{tpu_custom_call.1} parent=1 // pred_check
      _
    $region39: #{tpu_custom_call.1} parent=1 // pred_check_branch
      %781 = sbr.rel (0) target = $region41
    $region40: #{tpu_custom_call.1} parent=1 // pred_region
      %782 = dma.done [#allocation4], 128
    $region41: #{tpu_custom_call.1} parent=1 // pred_fallthru
      _
    %783 = vsyncpa [#allocation3], 1
    %784 = vsyncpa [#allocation6], 1
    %785 = vsyncpa [#allocation4], 1

</llo_original>
